<compile_context>
chip_gen: v7x
topology: tpu7x:2x2x1
jax: 0.10.0
libtpu: 0.0.40
codegen_flags: <defaults>
</compile_context>

<pallas_src>
import math

import jax
import jax.numpy as jnp
from jax.experimental import pallas as pl
from jax.experimental.pallas import tpu as pltpu


# ----------------------------------------------------------------------------
# Pallas kernel: fused QKV projection + multi-head scaled-dot-product attention
# ----------------------------------------------------------------------------
def _self_attention_kernel(x_ref, mask_ref, wqkv_ref, bqkv_ref, ctx_ref, probs_ref):
    # x_ref    : (1, S, H)      hidden states for this batch element
    # mask_ref : (1, 1, 1, S)   additive attention mask (0 valid / -1e4 masked)
    # wqkv_ref : (H, 3H)        fused projection weight, columns [Wq | Wk | Wv]
    # bqkv_ref : (1, 3H)        fused projection bias
    # ctx_ref  : (1, S, H)      context layer (heads concatenated on lanes)
    # probs_ref: (1, S, nh*S)   attention probs, heads concatenated on lanes
    _, S, H = x_ref.shape
    nh = probs_ref.shape[2] // S
    hd = H // nh
    inv_scale = 1.0 / math.sqrt(hd)

    x = x_ref[0]                      # (S, H)
    mask = mask_ref[0, 0]             # (1, S) -> broadcasts over query rows

    # Single fused QKV projection: one MXU matmul instead of 3*nh small ones.
    qkv = jnp.dot(x, wqkv_ref[...],
                  preferred_element_type=jnp.float32) + bqkv_ref[...]   # (S, 3H)

    ctx_heads = []
    prob_heads = []
    for h in range(nh):               # static unroll over heads (nh is small)
        q = qkv[:, h * hd:(h + 1) * hd]                  # (S, hd) static lane slices
        k = qkv[:, H + h * hd:H + (h + 1) * hd]
        v = qkv[:, 2 * H + h * hd:2 * H + (h + 1) * hd]

        # Contract on the trailing dim directly (MXU takes K transposed),
        # avoiding an explicit in-kernel transpose.
        scores = jnp.einsum("qd,kd->qk", q, k,
                            preferred_element_type=jnp.float32)          # (S, S)
        scores = scores * inv_scale + mask

        m = jnp.max(scores, axis=-1, keepdims=True)
        e = jnp.exp(scores - m)
        probs = e / jnp.sum(e, axis=-1, keepdims=True)                    # (S, S)

        ctx_heads.append(jnp.dot(probs, v, preferred_element_type=jnp.float32))
        prob_heads.append(probs)

    # Single lane-dense stores (one per output) instead of per-head 8-lane stores.
    ctx_ref[0] = jnp.concatenate(ctx_heads, axis=-1).astype(ctx_ref.dtype)       # (S, H)
    probs_ref[0] = jnp.concatenate(prob_heads, axis=-1).astype(probs_ref.dtype)  # (S, nh*S)


def self_attention_forward(params, hidden_states, attention_mask=None):
    """Returns (context_layer (B,S,H), attention_probs (B,nh,S,S))."""
    B, S, H = hidden_states.shape
    nh = params["num_heads"]
    wqkv = params["wqkv"]             # (H, 3H)
    bqkv = params["bqkv"]             # (1, 3H)

    if attention_mask is None:
        attention_mask = jnp.zeros((B, 1, 1, S), jnp.float32)
    attention_mask = attention_mask.astype(jnp.float32).reshape(B, 1, 1, S)

    ctx, probs_flat = pl.pallas_call(
        _self_attention_kernel,
        out_shape=(
            jax.ShapeDtypeStruct((B, S, H), jnp.float32),
            jax.ShapeDtypeStruct((B, S, nh * S), jnp.float32),
        ),
        grid=(B,),
        in_specs=[
            pl.BlockSpec((1, S, H), lambda b: (b, 0, 0)),        # hidden states
            pl.BlockSpec((1, 1, 1, S), lambda b: (b, 0, 0, 0)),  # additive mask
            pl.BlockSpec(wqkv.shape, lambda b: (0, 0)),          # fused W (resident)
            pl.BlockSpec(bqkv.shape, lambda b: (0, 0)),          # fused b (resident)
        ],
        out_specs=[
            pl.BlockSpec((1, S, H), lambda b: (b, 0, 0)),
            pl.BlockSpec((1, S, nh * S), lambda b: (b, 0, 0)),
        ],
        compiler_params=pltpu.CompilerParams(dimension_semantics=("parallel",)),
    )(hidden_states, attention_mask, wqkv, bqkv)

    # Lane-dense slab -> reference layout (B, nh, S, S): pure layout plumbing.
    attention_probs = probs_flat.reshape(B, S, nh, S).transpose(0, 2, 1, 3)
    return ctx, attention_probs


# ----------------------------------------------------------------------------
# Deterministic parameter construction (mirrors nn.Linear q/k/v)
# ----------------------------------------------------------------------------
def make_params(key, hidden_size, num_heads):
    ks = jax.random.split(key, 6)
    scale = 1.0 / math.sqrt(hidden_size)

    def lin(kw, kb):
        # Stored in "x @ W" form (i.e. torch weight transposed).
        w = scale * jax.random.normal(kw, (hidden_size, hidden_size), jnp.float32)
        b = 0.1 * jax.random.normal(kb, (hidden_size,), jnp.float32)
        return w, b

    wq, bq = lin(ks[0], ks[1])
    wk, bk = lin(ks[2], ks[3])
    wv, bv = lin(ks[4], ks[5])

    return {
        "num_heads": num_heads,
        "wq": wq, "wk": wk, "wv": wv, "bq": bq, "bk": bk, "bv": bv,
        # Fused ONCE at parameter-construction time (no per-call concat work):
        # columns ordered [Wq | Wk | Wv], each head-major inside its block.
        "wqkv": jnp.concatenate([wq, wk, wv], axis=1),            # (H, 3H)
        "bqkv": jnp.concatenate([bq, bk, bv]).reshape(1, 3 * hidden_size),
    }


# ----------------------------------------------------------------------------
# Pure-JAX reference (mirrors the PyTorch forward, default branch)
# ----------------------------------------------------------------------------
def self_attention_reference(params, hidden_states, attention_mask, num_heads):
    B, S, H = hidden_states.shape
    hd = H // num_heads
    hp = jax.lax.Precision.HIGHEST

    def proj(w, b):
        y = jnp.dot(hidden_states, w, precision=hp) + b
        return y.reshape(B, S, num_heads, hd).transpose(0, 2, 1, 3)  # (B, nh, S, hd)

    q = proj(params["wq"], params["bq"])
    k = proj(params["wk"], params["bk"])
    v = proj(params["wv"], params["bv"])

    scores = jnp.einsum("bhqd,bhkd->bhqk", q, k, precision=hp) / math.sqrt(hd)
    scores = scores + attention_mask
    probs = jax.nn.softmax(scores, axis=-1)
    ctx = jnp.einsum("bhqk,bhkd->bhqd", probs, v, precision=hp)
    ctx = ctx.transpose(0, 2, 1, 3).reshape(B, S, H)
    return ctx, probs


# ----------------------------------------------------------------------------
if __name__ == "__main__":
    key = jax.random.PRNGKey(0)
    k_params, k_x = jax.random.split(key)

    batch, seq, hidden, num_heads = 2, 8, 32, 4
    params = make_params(k_params, hidden, num_heads)
    hidden_states = jax.random.normal(k_x, (batch, seq, hidden), jnp.float32)

    # BERT-style additive mask: 0 for valid keys, -1e4 for padded keys.
    key_valid = jnp.ones((batch, seq), jnp.float32).at[1, -2:].set(0.0)
    attention_mask = (1.0 - key_valid)[:, None, None, :] * -10000.0

    ctx, probs = self_attention_forward(params, hidden_states, attention_mask)
    jax.block_until_ready(ctx)
    jax.block_until_ready(probs)

    ref_ctx, ref_probs = self_attention_reference(
        params, hidden_states, attention_mask, num_heads)

    assert ctx.shape == (batch, seq, hidden)
    assert probs.shape == (batch, num_heads, seq, seq)
    assert jnp.allclose(ctx, ref_ctx, atol=2e-4, rtol=2e-4), \
        float(jnp.max(jnp.abs(ctx - ref_ctx)))
    assert jnp.allclose(probs, ref_probs, atol=2e-4, rtol=2e-4), \
        float(jnp.max(jnp.abs(probs - ref_probs)))

    print("KERNEL_OK")
</pallas_src>

<mosaic_0001>
module attributes {stable_mosaic.version = 11 : i64} {
  func.func @_self_attention_kernel(%arg0: i32, %arg1: memref<1x8x32xf32, #tpu.memory_space<vmem>>, %arg2: memref<1x1x1x8xf32, #tpu.memory_space<vmem>>, %arg3: memref<32x96xf32, #tpu.memory_space<vmem>>, %arg4: memref<1x96xf32, #tpu.memory_space<vmem>>, %arg5: memref<1x8x32xf32, #tpu.memory_space<vmem>>, %arg6: memref<1x8x32xf32, #tpu.memory_space<vmem>>) attributes {dimension_semantics = [#tpu.dimension_semantics<parallel>], iteration_bounds = array<i64: 2>, scalar_prefetch = 0 : i64, scratch_operands = 0 : i64, tpu.core_type = #tpu.core_type<tc>, window_params = [{transform_indices = @transform_0, window_bounds = array<i64: 1, 8, 32>}, {transform_indices = @transform_1, window_bounds = array<i64: 1, 1, 1, 8>}, {pipeline_mode = #tpu.pipeline_mode<synchronous>, transform_indices = @transform_2, window_bounds = array<i64: 32, 96>}, {pipeline_mode = #tpu.pipeline_mode<synchronous>, transform_indices = @transform_3, window_bounds = array<i64: 1, 96>}, {transform_indices = @transform_4, window_bounds = array<i64: 1, 8, 32>}, {transform_indices = @transform_5, window_bounds = array<i64: 1, 8, 32>}]} {
    %c0 = arith.constant 0 : index
    %c0_0 = arith.constant 0 : index
    %c0_1 = arith.constant 0 : index
    %0 = vector.load %arg1[%c0, %c0_0, %c0_1] : memref<1x8x32xf32, #tpu.memory_space<vmem>>, vector<1x8x32xf32>
    %1 = vector.shape_cast %0 : vector<1x8x32xf32> to vector<8x32xf32>
    %c0_2 = arith.constant 0 : index
    %c0_3 = arith.constant 0 : index
    %c0_4 = arith.constant 0 : index
    %c0_5 = arith.constant 0 : index
    %2 = vector.load %arg2[%c0_2, %c0_3, %c0_4, %c0_5] : memref<1x1x1x8xf32, #tpu.memory_space<vmem>>, vector<1x1x1x8xf32>
    %3 = vector.shape_cast %2 : vector<1x1x1x8xf32> to vector<1x8xf32>
    %c0_6 = arith.constant 0 : index
    %c0_7 = arith.constant 0 : index
    %4 = vector.load %arg3[%c0_6, %c0_7] : memref<32x96xf32, #tpu.memory_space<vmem>>, vector<32x96xf32>
    %cst = arith.constant dense<0.000000e+00> : vector<8x96xf32>
    %5 = tpu.matmul %1, %4, %cst {dimension_numbers = #tpu.dot_dimension_numbers<[1], [0], [0], [1], [0, 0, 1, 1], [], []>} : vector<8x32xf32>, vector<32x96xf32>, vector<8x96xf32> -> vector<8x96xf32>
    %c0_8 = arith.constant 0 : index
    %c0_9 = arith.constant 0 : index
    %6 = vector.load %arg4[%c0_8, %c0_9] : memref<1x96xf32, #tpu.memory_space<vmem>>, vector<1x96xf32>
    %7 = vector.broadcast %6 : vector<1x96xf32> to vector<8x96xf32>
    %8 = arith.addf %5, %7 : vector<8x96xf32>
    %9 = vector.extract_strided_slice %8 {offsets = [0, 0], sizes = [8, 8], strides = [1, 1]} : vector<8x96xf32> to vector<8x8xf32>
    %10 = vector.extract_strided_slice %8 {offsets = [0, 32], sizes = [8, 8], strides = [1, 1]} : vector<8x96xf32> to vector<8x8xf32>
    %11 = vector.extract_strided_slice %8 {offsets = [0, 64], sizes = [8, 8], strides = [1, 1]} : vector<8x96xf32> to vector<8x8xf32>
    "tpu.trace_start"() <{level = 10 : i32, message = "qd,kd->qk"}> : () -> ()
    %cst_10 = arith.constant dense<0.000000e+00> : vector<8x8xf32>
    %12 = tpu.matmul %9, %10, %cst_10 {dimension_numbers = #tpu.dot_dimension_numbers<[1], [1], [0], [0], [0, 0, 1, 0], [], []>} : vector<8x8xf32>, vector<8x8xf32>, vector<8x8xf32> -> vector<8x8xf32>
    "tpu.trace_stop"() : () -> ()
    %cst_11 = arith.constant 0.353553385 : f32
    %13 = vector.broadcast %cst_11 : f32 to vector<8x8xf32>
    %14 = arith.mulf %12, %13 : vector<8x8xf32>
    %15 = vector.broadcast %3 : vector<1x8xf32> to vector<8x8xf32>
    %16 = arith.addf %14, %15 : vector<8x8xf32>
    %cst_12 = arith.constant dense<0xFF800000> : vector<8xf32>
    %17 = vector.multi_reduction <maximumf>, %16, %cst_12 [1] : vector<8x8xf32> to vector<8xf32>
    %18 = vector.shape_cast %17 : vector<8xf32> to vector<8x1xf32>
    %19 = vector.broadcast %18 : vector<8x1xf32> to vector<8x8xf32>
    %20 = arith.subf %16, %19 : vector<8x8xf32>
    %21 = math.exp %20 : vector<8x8xf32>
    %cst_13 = arith.constant dense<0.000000e+00> : vector<8xf32>
    %22 = vector.multi_reduction <add>, %21, %cst_13 [1] : vector<8x8xf32> to vector<8xf32>
    %23 = vector.shape_cast %22 : vector<8xf32> to vector<8x1xf32>
    %24 = vector.broadcast %23 : vector<8x1xf32> to vector<8x8xf32>
    %25 = arith.divf %21, %24 : vector<8x8xf32>
    %cst_14 = arith.constant dense<0.000000e+00> : vector<8x8xf32>
    %26 = tpu.matmul %25, %11, %cst_14 {dimension_numbers = #tpu.dot_dimension_numbers<[1], [0], [0], [1], [0, 0, 1, 1], [], []>} : vector<8x8xf32>, vector<8x8xf32>, vector<8x8xf32> -> vector<8x8xf32>
    %27 = vector.extract_strided_slice %8 {offsets = [0, 8], sizes = [8, 8], strides = [1, 1]} : vector<8x96xf32> to vector<8x8xf32>
    %28 = vector.extract_strided_slice %8 {offsets = [0, 40], sizes = [8, 8], strides = [1, 1]} : vector<8x96xf32> to vector<8x8xf32>
    %29 = vector.extract_strided_slice %8 {offsets = [0, 72], sizes = [8, 8], strides = [1, 1]} : vector<8x96xf32> to vector<8x8xf32>
    "tpu.trace_start"() <{level = 10 : i32, message = "qd,kd->qk"}> : () -> ()
    %cst_15 = arith.constant dense<0.000000e+00> : vector<8x8xf32>
    %30 = tpu.matmul %27, %28, %cst_15 {dimension_numbers = #tpu.dot_dimension_numbers<[1], [1], [0], [0], [0, 0, 1, 0], [], []>} : vector<8x8xf32>, vector<8x8xf32>, vector<8x8xf32> -> vector<8x8xf32>
    "tpu.trace_stop"() : () -> ()
    %cst_16 = arith.constant 0.353553385 : f32
    %31 = vector.broadcast %cst_16 : f32 to vector<8x8xf32>
    %32 = arith.mulf %30, %31 : vector<8x8xf32>
    %33 = vector.broadcast %3 : vector<1x8xf32> to vector<8x8xf32>
    %34 = arith.addf %32, %33 : vector<8x8xf32>
    %cst_17 = arith.constant dense<0xFF800000> : vector<8xf32>
    %35 = vector.multi_reduction <maximumf>, %34, %cst_17 [1] : vector<8x8xf32> to vector<8xf32>
    %36 = vector.shape_cast %35 : vector<8xf32> to vector<8x1xf32>
    %37 = vector.broadcast %36 : vector<8x1xf32> to vector<8x8xf32>
    %38 = arith.subf %34, %37 : vector<8x8xf32>
    %39 = math.exp %38 : vector<8x8xf32>
    %cst_18 = arith.constant dense<0.000000e+00> : vector<8xf32>
    %40 = vector.multi_reduction <add>, %39, %cst_18 [1] : vector<8x8xf32> to vector<8xf32>
    %41 = vector.shape_cast %40 : vector<8xf32> to vector<8x1xf32>
    %42 = vector.broadcast %41 : vector<8x1xf32> to vector<8x8xf32>
    %43 = arith.divf %39, %42 : vector<8x8xf32>
    %cst_19 = arith.constant dense<0.000000e+00> : vector<8x8xf32>
    %44 = tpu.matmul %43, %29, %cst_19 {dimension_numbers = #tpu.dot_dimension_numbers<[1], [0], [0], [1], [0, 0, 1, 1], [], []>} : vector<8x8xf32>, vector<8x8xf32>, vector<8x8xf32> -> vector<8x8xf32>
    %45 = vector.extract_strided_slice %8 {offsets = [0, 16], sizes = [8, 8], strides = [1, 1]} : vector<8x96xf32> to vector<8x8xf32>
    %46 = vector.extract_strided_slice %8 {offsets = [0, 48], sizes = [8, 8], strides = [1, 1]} : vector<8x96xf32> to vector<8x8xf32>
    %47 = vector.extract_strided_slice %8 {offsets = [0, 80], sizes = [8, 8], strides = [1, 1]} : vector<8x96xf32> to vector<8x8xf32>
    "tpu.trace_start"() <{level = 10 : i32, message = "qd,kd->qk"}> : () -> ()
    %cst_20 = arith.constant dense<0.000000e+00> : vector<8x8xf32>
    %48 = tpu.matmul %45, %46, %cst_20 {dimension_numbers = #tpu.dot_dimension_numbers<[1], [1], [0], [0], [0, 0, 1, 0], [], []>} : vector<8x8xf32>, vector<8x8xf32>, vector<8x8xf32> -> vector<8x8xf32>
    "tpu.trace_stop"() : () -> ()
    %cst_21 = arith.constant 0.353553385 : f32
    %49 = vector.broadcast %cst_21 : f32 to vector<8x8xf32>
    %50 = arith.mulf %48, %49 : vector<8x8xf32>
    %51 = vector.broadcast %3 : vector<1x8xf32> to vector<8x8xf32>
    %52 = arith.addf %50, %51 : vector<8x8xf32>
    %cst_22 = arith.constant dense<0xFF800000> : vector<8xf32>
    %53 = vector.multi_reduction <maximumf>, %52, %cst_22 [1] : vector<8x8xf32> to vector<8xf32>
    %54 = vector.shape_cast %53 : vector<8xf32> to vector<8x1xf32>
    %55 = vector.broadcast %54 : vector<8x1xf32> to vector<8x8xf32>
    %56 = arith.subf %52, %55 : vector<8x8xf32>
    %57 = math.exp %56 : vector<8x8xf32>
    %cst_23 = arith.constant dense<0.000000e+00> : vector<8xf32>
    %58 = vector.multi_reduction <add>, %57, %cst_23 [1] : vector<8x8xf32> to vector<8xf32>
    %59 = vector.shape_cast %58 : vector<8xf32> to vector<8x1xf32>
    %60 = vector.broadcast %59 : vector<8x1xf32> to vector<8x8xf32>
    %61 = arith.divf %57, %60 : vector<8x8xf32>
    %cst_24 = arith.constant dense<0.000000e+00> : vector<8x8xf32>
    %62 = tpu.matmul %61, %47, %cst_24 {dimension_numbers = #tpu.dot_dimension_numbers<[1], [0], [0], [1], [0, 0, 1, 1], [], []>} : vector<8x8xf32>, vector<8x8xf32>, vector<8x8xf32> -> vector<8x8xf32>
    %63 = vector.extract_strided_slice %8 {offsets = [0, 24], sizes = [8, 8], strides = [1, 1]} : vector<8x96xf32> to vector<8x8xf32>
    %64 = vector.extract_strided_slice %8 {offsets = [0, 56], sizes = [8, 8], strides = [1, 1]} : vector<8x96xf32> to vector<8x8xf32>
    %65 = vector.extract_strided_slice %8 {offsets = [0, 88], sizes = [8, 8], strides = [1, 1]} : vector<8x96xf32> to vector<8x8xf32>
    "tpu.trace_start"() <{level = 10 : i32, message = "qd,kd->qk"}> : () -> ()
    %cst_25 = arith.constant dense<0.000000e+00> : vector<8x8xf32>
    %66 = tpu.matmul %63, %64, %cst_25 {dimension_numbers = #tpu.dot_dimension_numbers<[1], [1], [0], [0], [0, 0, 1, 0], [], []>} : vector<8x8xf32>, vector<8x8xf32>, vector<8x8xf32> -> vector<8x8xf32>
    "tpu.trace_stop"() : () -> ()
    %cst_26 = arith.constant 0.353553385 : f32
    %67 = vector.broadcast %cst_26 : f32 to vector<8x8xf32>
    %68 = arith.mulf %66, %67 : vector<8x8xf32>
    %69 = vector.broadcast %3 : vector<1x8xf32> to vector<8x8xf32>
    %70 = arith.addf %68, %69 : vector<8x8xf32>
    %cst_27 = arith.constant dense<0xFF800000> : vector<8xf32>
    %71 = vector.multi_reduction <maximumf>, %70, %cst_27 [1] : vector<8x8xf32> to vector<8xf32>
    %72 = vector.shape_cast %71 : vector<8xf32> to vector<8x1xf32>
    %73 = vector.broadcast %72 : vector<8x1xf32> to vector<8x8xf32>
    %74 = arith.subf %70, %73 : vector<8x8xf32>
    %75 = math.exp %74 : vector<8x8xf32>
    %cst_28 = arith.constant dense<0.000000e+00> : vector<8xf32>
    %76 = vector.multi_reduction <add>, %75, %cst_28 [1] : vector<8x8xf32> to vector<8xf32>
    %77 = vector.shape_cast %76 : vector<8xf32> to vector<8x1xf32>
    %78 = vector.broadcast %77 : vector<8x1xf32> to vector<8x8xf32>
    %79 = arith.divf %75, %78 : vector<8x8xf32>
    %cst_29 = arith.constant dense<0.000000e+00> : vector<8x8xf32>
    %80 = tpu.matmul %79, %65, %cst_29 {dimension_numbers = #tpu.dot_dimension_numbers<[1], [0], [0], [1], [0, 0, 1, 1], [], []>} : vector<8x8xf32>, vector<8x8xf32>, vector<8x8xf32> -> vector<8x8xf32>
    %81 = tpu.concatenate %26, %44, %62, %80 in 1 : vector<8x8xf32>, vector<8x8xf32>, vector<8x8xf32>, vector<8x8xf32> -> vector<8x32xf32>
    %c0_30 = arith.constant 0 : index
    %c0_31 = arith.constant 0 : index
    %c0_32 = arith.constant 0 : index
    %82 = vector.load %arg5[%c0_30, %c0_31, %c0_32] : memref<1x8x32xf32, #tpu.memory_space<vmem>>, vector<1x8x32xf32>
    %83 = vector.shape_cast %82 : vector<1x8x32xf32> to vector<8x32xf32>
    %84 = vector.shape_cast %81 : vector<8x32xf32> to vector<1x8x32xf32>
    tpu.vector_store %arg5[%c0_30, %c0_31, %c0_32], %84 {strides = array<i32>} : memref<1x8x32xf32, #tpu.memory_space<vmem>>, vector<1x8x32xf32>,
    %85 = tpu.concatenate %25, %43, %61, %79 in 1 : vector<8x8xf32>, vector<8x8xf32>, vector<8x8xf32>, vector<8x8xf32> -> vector<8x32xf32>
    %c0_33 = arith.constant 0 : index
    %c0_34 = arith.constant 0 : index
    %c0_35 = arith.constant 0 : index
    %86 = vector.load %arg6[%c0_33, %c0_34, %c0_35] : memref<1x8x32xf32, #tpu.memory_space<vmem>>, vector<1x8x32xf32>
    %87 = vector.shape_cast %86 : vector<1x8x32xf32> to vector<8x32xf32>
    %88 = vector.shape_cast %85 : vector<8x32xf32> to vector<1x8x32xf32>
    tpu.vector_store %arg6[%c0_33, %c0_34, %c0_35], %88 {strides = array<i32>} : memref<1x8x32xf32, #tpu.memory_space<vmem>>, vector<1x8x32xf32>,
    return
  }
  func.func @transform_0(%arg0: i32) -> (i32, i32, i32) {
    %c0_i32 = arith.constant 0 : i32
    %c0_i32_0 = arith.constant 0 : i32
    %c0_i32_1 = arith.constant 0 : i32
    return %arg0, %c0_i32, %c0_i32_0 : i32, i32, i32
  }
  func.func @transform_1(%arg0: i32) -> (i32, i32, i32, i32) {
    %c0_i32 = arith.constant 0 : i32
    %c0_i32_0 = arith.constant 0 : i32
    %c0_i32_1 = arith.constant 0 : i32
    %c0_i32_2 = arith.constant 0 : i32
    return %arg0, %c0_i32, %c0_i32_0, %c0_i32_1 : i32, i32, i32, i32
  }
  func.func @transform_2(%arg0: i32) -> (i32, i32) {
    %c0_i32 = arith.constant 0 : i32
    %c0_i32_0 = arith.constant 0 : i32
    %c0_i32_1 = arith.constant 0 : i32
    return %c0_i32, %c0_i32_0 : i32, i32
  }
  func.func @transform_3(%arg0: i32) -> (i32, i32) {
    %c0_i32 = arith.constant 0 : i32
    %c0_i32_0 = arith.constant 0 : i32
    %c0_i32_1 = arith.constant 0 : i32
    return %c0_i32, %c0_i32_0 : i32, i32
  }
  func.func @transform_4(%arg0: i32) -> (i32, i32, i32) {
    %c0_i32 = arith.constant 0 : i32
    %c0_i32_0 = arith.constant 0 : i32
    %c0_i32_1 = arith.constant 0 : i32
    return %arg0, %c0_i32, %c0_i32_0 : i32, i32, i32
  }
  func.func @transform_5(%arg0: i32) -> (i32, i32, i32) {
    %c0_i32 = arith.constant 0 : i32
    %c0_i32_0 = arith.constant 0 : i32
    %c0_i32_1 = arith.constant 0 : i32
    return %arg0, %c0_i32, %c0_i32_0 : i32, i32, i32
  }
}

</mosaic_0001>

<llo_original>
// kernel: tpu_custom_call.1
$region0: #{tpu_custom_call.1}
  #allocation0 [shape = 'u32[]', space=smem, size = 0x4, offset = 0x4, fixed_abs, tag = 'smem constant byte address 0x4 - core index']
  #allocation1 [shape = 'u32[144,128]{1,0:T(1,128)}', space=vmem, size = 0x12000, scoped, tag = 'internal scratch']
  %s0 = inlined_call_operand.hbm [shape: f32[2,8,32], index: 0, kind: input, shape index: {}]
  %s1 = inlined_call_operand.vmem [shape: f32[2,1,1,8], index: 1, kind: input, shape index: {}]
  %s2 = inlined_call_operand.hbm [shape: f32[32,96], index: 2, kind: input, shape index: {}]
  %s3 = inlined_call_operand.vmem [shape: f32[1,96], index: 3, kind: input, shape index: {}]
  %s4 = inlined_call_operand.hbm [shape: f32[2,8,32], index: 4, kind: output, shape index: {0}]
  %s5 = inlined_call_operand.hbm [shape: f32[2,8,32], index: 5, kind: output, shape index: {1}]
  %6 = xla_tuple %s4, %s5
  %s7 = sld [smem:[#allocation0]]
  $region65: #{tpu_custom_call.1} parent=0
    _
  %s9 = ssub.s32 1, %s7
  %s10 = scalar_select 0, %s9, %s7
  $region1: #{tpu_custom_call.1} parent=0
    #allocation2 [shape = 'u8[8192]{0}', space=vmem, size = 0x2000, scoped, tag = 'input window, operand 0']
    #allocation3 [shape = 's32[2]{0}', space=sflag, size = 0x8, scoped, tag = 'scoped memory for tpu_custom_call.1']
    #allocation4 [shape = 's32[2]{0}', space=sflag, size = 0x8, scoped, tag = 'scoped memory for tpu_custom_call.1']
    #allocation5 [shape = 'u8[16384]{0}', space=vmem, size = 0x4000, scoped, tag = 'input window, operand 2, single buffered']
    #allocation6 [shape = 's32[1]{0}', space=sflag, size = 0x4, scoped, tag = 'scoped memory for tpu_custom_call.1']
    #allocation7 [shape = 'u8[8192]{0}', space=vmem, size = 0x2000, scoped, tag = 'output window, operand 0']
    #allocation8 [shape = 'u8[8192]{0}', space=vmem, size = 0x2000, scoped, tag = 'output window, operand 1']
    #allocation9 [shape = 's32[2]{0}', space=sflag, size = 0x8, scoped, tag = 'scoped memory for tpu_custom_call.1']
    %11 = vsyncpa [#allocation3], 0
    %s12 = scalar_lea.sflag [#allocation3], 1
    %13 = vsyncpa %s12, 0
    %14 = vsyncpa [#allocation6], 0
    %15 = vsyncpa [#allocation4], 0
    %s16 = scalar_lea.sflag [#allocation4], 1
    %17 = vsyncpa %s16, 0
    %18 = vsyncpa [#allocation9], 0
    %s19 = scalar_lea.sflag [#allocation9], 1
    %20 = vsyncpa %s19, 0
    loop: start=0, step=1, limit=4
    $region2: #{tpu_custom_call.1} parent=1 // loop_pre_header
      _
    $region3: #{tpu_custom_call.1} parent=1 // loop_header
      %s22 = sphi 0, %s26
      %p23 = scmp.ge.s32.totalorder %s22, 4
      %s32 = sphi 0, %s34
      %s35 = sphi 0, %s32
      %s36 = sphi 0, %s35
      %s52 = sphi 0, %s36
      %s58 = sphi 0, %s60
      %s61 = sphi 0, %s58
      %s62 = sphi 0, %s61
      %s78 = sphi 0, %s62
      %s82 = sphi 0, %s82
      %s84 = sphi 0, %s82
      %s85 = sphi 0, %s84
      %s99 = sphi 0, %s85
      %s103 = sphi 0, %s103
      %s105 = sphi 0, %s103
      %s106 = sphi 0, %s105
      %s120 = sphi 0, %s106
      %s126 = sphi 0, %s128
      %s129 = sphi 0, %s126
      %s130 = sphi 0, %s129
      %s146 = sphi 0, %s130
      %s152 = sphi 0, %s154
      %s155 = sphi 0, %s152
      %s156 = sphi 0, %s155
      %s172 = sphi 0, %s156
    $region4: #{tpu_custom_call.1} parent=1 // loop_header_branch
      %25 = sbr.rel (%p23) target = $region8
    $region5: #{tpu_custom_call.1} parent=1 // loop_body
      %s27 = ssub.s32 %s22, 1
      %s28 = ssub.s32 %s22, 2
      %s29 = sadd.s32 %s22, 1
      %s30 = ssub.s32 %s22, %s29
      %p31 = scmp.eq.s32.totalorder %s30, 0
      %s33 = sadd.s32 %s32, 1
      %s34 = scalar_select %p31, %s32, %s33
      %p37 = pneg %p31
      %p38 = scmp.eq.s32.totalorder %s22, 1
      %p39 = por %p37, %p38
      %p40 = scmp.ne.s32.totalorder %s32, %s35
      %p41 = scmp.eq.s32.totalorder %s22, 0
      %p42 = por %p40, %p41
      %p43 = scmp.ne.s32.totalorder %s32, %s35
      %p44 = scmp.eq.s32.totalorder %s27, 1
      %p45 = por %p43, %p44
      %p46 = scmp.ne.s32.totalorder %s35, %s36
      %p47 = scmp.eq.s32.totalorder %s27, 0
      %p48 = por %p46, %p47
      %p49 = scmp.ne.s32.totalorder %s35, %s36
      %p50 = scmp.eq.s32.totalorder %s28, 1
      %p51 = por %p49, %p50
      %p53 = scmp.ne.s32.totalorder %s36, %s52
      %p54 = scmp.eq.s32.totalorder %s28, 0
      %p55 = por %p53, %p54
      %s56 = ssub.s32 %s22, %s29
      %p57 = scmp.eq.s32.totalorder %s56, 0
      %s59 = sadd.s32 %s58, 1
      %s60 = scalar_select %p57, %s58, %s59
      %p63 = pneg %p57
      %p64 = scmp.eq.s32.totalorder %s22, 1
      %p65 = por %p63, %p64
      %p66 = scmp.ne.s32.totalorder %s58, %s61
      %p67 = scmp.eq.s32.totalorder %s22, 0
      %p68 = por %p66, %p67
      %p69 = scmp.ne.s32.totalorder %s58, %s61
      %p70 = scmp.eq.s32.totalorder %s27, 1
      %p71 = por %p69, %p70
      %p72 = scmp.ne.s32.totalorder %s61, %s62
      %p73 = scmp.eq.s32.totalorder %s27, 0
      %p74 = por %p72, %p73
      %p75 = scmp.ne.s32.totalorder %s61, %s62
      %p76 = scmp.eq.s32.totalorder %s28, 1
      %p77 = por %p75, %p76
      %p79 = scmp.ne.s32.totalorder %s62, %s78
      %p80 = scmp.eq.s32.totalorder %s28, 0
      %p81 = por %p79, %p80
      %s83 = sadd.s32 %s82, 1
      %p86 = scmp.eq.s32.totalorder %s22, 1
      %p87 = scmp.ne.s32.totalorder %s82, %s84
      %p88 = scmp.eq.s32.totalorder %s22, 0
      %p89 = por %p87, %p88
      %p90 = scmp.ne.s32.totalorder %s82, %s84
      %p91 = scmp.eq.s32.totalorder %s27, 1
      %p92 = por %p90, %p91
      %p93 = scmp.ne.s32.totalorder %s84, %s85
      %p94 = scmp.eq.s32.totalorder %s27, 0
      %p95 = por %p93, %p94
      %p96 = scmp.ne.s32.totalorder %s84, %s85
      %p97 = scmp.eq.s32.totalorder %s28, 1
      %p98 = por %p96, %p97
      %p100 = scmp.ne.s32.totalorder %s85, %s99
      %p101 = scmp.eq.s32.totalorder %s28, 0
      %p102 = por %p100, %p101
      %s104 = sadd.s32 %s103, 1
      %p107 = scmp.eq.s32.totalorder %s22, 1
      %p108 = scmp.ne.s32.totalorder %s103, %s105
      %p109 = scmp.eq.s32.totalorder %s22, 0
      %p110 = por %p108, %p109
      %p111 = scmp.ne.s32.totalorder %s103, %s105
      %p112 = scmp.eq.s32.totalorder %s27, 1
      %p113 = por %p111, %p112
      %p114 = scmp.ne.s32.totalorder %s105, %s106
      %p115 = scmp.eq.s32.totalorder %s27, 0
      %p116 = por %p114, %p115
      %p117 = scmp.ne.s32.totalorder %s105, %s106
      %p118 = scmp.eq.s32.totalorder %s28, 1
      %p119 = por %p117, %p118
      %p121 = scmp.ne.s32.totalorder %s106, %s120
      %p122 = scmp.eq.s32.totalorder %s28, 0
      %p123 = por %p121, %p122
      %s124 = ssub.s32 %s22, %s29
      %p125 = scmp.eq.s32.totalorder %s124, 0
      %s127 = sadd.s32 %s126, 1
      %s128 = scalar_select %p125, %s126, %s127
      %p131 = pneg %p125
      %p132 = scmp.eq.s32.totalorder %s22, 1
      %p133 = por %p131, %p132
      %p134 = scmp.ne.s32.totalorder %s126, %s129
      %p135 = scmp.eq.s32.totalorder %s22, 0
      %p136 = por %p134, %p135
      %p137 = scmp.ne.s32.totalorder %s126, %s129
      %p138 = scmp.eq.s32.totalorder %s27, 1
      %p139 = por %p137, %p138
      %p140 = scmp.ne.s32.totalorder %s129, %s130
      %p141 = scmp.eq.s32.totalorder %s27, 0
      %p142 = por %p140, %p141
      %p143 = scmp.ne.s32.totalorder %s129, %s130
      %p144 = scmp.eq.s32.totalorder %s28, 1
      %p145 = por %p143, %p144
      %p147 = scmp.ne.s32.totalorder %s130, %s146
      %p148 = scmp.eq.s32.totalorder %s28, 0
      %p149 = por %p147, %p148
      %s150 = ssub.s32 %s22, %s29
      %p151 = scmp.eq.s32.totalorder %s150, 0
      %s153 = sadd.s32 %s152, 1
      %s154 = scalar_select %p151, %s152, %s153
      %p157 = pneg %p151
      %p158 = scmp.eq.s32.totalorder %s22, 1
      %p159 = por %p157, %p158
      %p160 = scmp.ne.s32.totalorder %s152, %s155
      %p161 = scmp.eq.s32.totalorder %s22, 0
      %p162 = por %p160, %p161
      %p163 = scmp.ne.s32.totalorder %s152, %s155
      %p164 = scmp.eq.s32.totalorder %s27, 1
      %p165 = por %p163, %p164
      %p166 = scmp.ne.s32.totalorder %s155, %s156
      %p167 = scmp.eq.s32.totalorder %s27, 0
      %p168 = por %p166, %p167
      %p169 = scmp.ne.s32.totalorder %s155, %s156
      %p170 = scmp.eq.s32.totalorder %s28, 1
      %p171 = por %p169, %p170
      %p173 = scmp.ne.s32.totalorder %s156, %s172
      %p174 = scmp.eq.s32.totalorder %s28, 0
      %p175 = por %p173, %p174
      %p176 = scmp.le.s32.totalorder 1, %s22
      %p177 = scmp.lt.s32.totalorder %s22, 3
      %p178 = pnand %p176, %p177
      %p179 = pneg %p178
      // Predicated region
      $region9: #{tpu_custom_call.1} parent=5 // pred_check
        _
      $region10: #{tpu_custom_call.1} parent=5 // pred_check_branch
        %181 = sbr.rel (%p178) target = $region12
      $region11: #{tpu_custom_call.1} parent=5 // pred_region
        %s182 = ssub.s32 %s22, 1
        // Predicated region
        $region13: #{tpu_custom_call.1} parent=11 // pred_check
          %p183 = pneg %p95
        $region14: #{tpu_custom_call.1} parent=11 // pred_check_branch
          %185 = sbr.rel (%p183) target = $region16
        $region15: #{tpu_custom_call.1} parent=11 // pred_region
          %s187 = ssub.s32 512, 512
          %188 = vsyncadd [#allocation6], %s187
          %s189 = sshll.u32 [#allocation5], 4
          %s190 = int_to_ptr.vmem [resolvable:$true] %s189
          %195 = dma.hbm_to_vmem [thread:$0]  %s2, 512, %s190, [#allocation6], 128, 128, 8
        $region16: #{tpu_custom_call.1} parent=11 // pred_fallthru
          _
        // Predicated region
        $region17: #{tpu_custom_call.1} parent=11 // pred_check
          %p196 = pneg %p116
        $region18: #{tpu_custom_call.1} parent=11 // pred_check_branch
          %198 = sbr.rel (%p196) target = $region20
        $region19: #{tpu_custom_call.1} parent=11 // pred_region
          _
        $region20: #{tpu_custom_call.1} parent=11 // pred_fallthru
          _
      $region12: #{tpu_custom_call.1} parent=5 // pred_fallthru
        _
      %p199 = scmp.lt.s32.totalorder %s22, 2
      // Predicated region
      $region21: #{tpu_custom_call.1} parent=5 // pred_check
        %p200 = pneg %p199
      $region22: #{tpu_custom_call.1} parent=5 // pred_check_branch
        %202 = sbr.rel (%p200) target = $region24
      $region23: #{tpu_custom_call.1} parent=5 // pred_region
        // Predicated region
        $region25: #{tpu_custom_call.1} parent=23 // pred_check
          %p203 = pneg %p42
        $region26: #{tpu_custom_call.1} parent=23 // pred_check_branch
          %205 = sbr.rel (%p203) target = $region28
        $region27: #{tpu_custom_call.1} parent=23 // pred_region
          %s206 = sand.u32 %s32, 1
          %s207 = scalar_lea.sflag [#allocation3], %s206
          %s208 = sand.u32 %s32, 1
          %s209 = smul.addr %s208, 8
          %s210 = scalar_lea.vmem [#allocation2], %s209
          %s212 = ssub.s32 128, 128
          %213 = vsyncadd %s207, %s212
          %s214 = smul.addr %s22, 128
          %s215 = scalar_lea.hbm %s0, %s214
          %s217 = sshll.u32 %s210, 4
          %s218 = int_to_ptr.vmem [resolvable:$true] %s217
          %220 = dma.hbm_to_vmem [thread:$0]  %s215, 128, %s218, %s207
        $region28: #{tpu_custom_call.1} parent=23 // pred_fallthru
          _
        // Predicated region
        $region29: #{tpu_custom_call.1} parent=23 // pred_check
          %p221 = pneg %p68
        $region30: #{tpu_custom_call.1} parent=23 // pred_check_branch
          %223 = sbr.rel (%p221) target = $region32
        $region31: #{tpu_custom_call.1} parent=23 // pred_region
          %p224 = scmp.lt.s32.totalorder %s22, 1
          %s225 = scalar_select %p224, %s22, 1
          %s226 = scalar_lea.vmem %s1, %s225
        $region32: #{tpu_custom_call.1} parent=23 // pred_fallthru
          _
      $region24: #{tpu_custom_call.1} parent=5 // pred_fallthru
        _
      %p227 = scmp.le.s32.totalorder 1, %s22
      %p228 = scmp.lt.s32.totalorder %s22, 3
      %p229 = pnand %p227, %p228
      %p230 = pneg %p229
      // Predicated region
      $region33: #{tpu_custom_call.1} parent=5 // pred_check
        _
      $region34: #{tpu_custom_call.1} parent=5 // pred_check_branch
        %232 = sbr.rel (%p229) target = $region36
      $region35: #{tpu_custom_call.1} parent=5 // pred_region
        %s233 = ssub.s32 %s22, 1
        %s234 = sand.u32 %s35, 1
        %s235 = scalar_lea.sflag [#allocation3], %s234
        %s236 = sand.u32 %s35, 1
        %s237 = smul.addr %s236, 8
        %s238 = scalar_lea.vmem [#allocation2], %s237
        // Predicated region
        $region37: #{tpu_custom_call.1} parent=35 // pred_check
          %p239 = pneg %p48
        $region38: #{tpu_custom_call.1} parent=35 // pred_check_branch
          %241 = sbr.rel (%p239) target = $region40
        $region39: #{tpu_custom_call.1} parent=35 // pred_region
          %242 = dma.done %s235, 128
        $region40: #{tpu_custom_call.1} parent=35 // pred_fallthru
          _
        // Predicated region
        $region41: #{tpu_custom_call.1} parent=35 // pred_check
          %p243 = pneg %p95
        $region42: #{tpu_custom_call.1} parent=35 // pred_check_branch
          %245 = sbr.rel (%p243) target = $region44
        $region43: #{tpu_custom_call.1} parent=35 // pred_region
          %246 = dma.done [#allocation6], 512
        $region44: #{tpu_custom_call.1} parent=35 // pred_fallthru
          _
        %s247 = sand.u32 %s35, 1
        %s248 = scalar_lea.sflag [#allocation3], %s247
        %s249 = sand.u32 %s35, 1
        %s250 = smul.addr %s249, 8
        %s251 = scalar_lea.vmem [#allocation2], %s250
        %p252 = pneg %p48
        %p253 = pneg %p45
        %p254 = scmp.lt.s32.totalorder %s27, 1
        %s255 = scalar_select %p254, %s27, 1
        %s256 = scalar_lea.vmem %s1, %s255
        %p257 = pneg %p74
        %p258 = pneg %p71
        %p259 = pneg %p95
        %p260 = pneg %p92
        %p261 = pneg %p116
        %p262 = pneg %p113
        %p263 = pneg %p142
        %p264 = pneg %p139
        %s265 = sand.u32 %s129, 1
        %s266 = scalar_lea.sflag [#allocation4], %s265
        %s267 = sand.u32 %s129, 1
        %s268 = smul.addr %s267, 8
        %s269 = scalar_lea.vmem [#allocation7], %s268
        %p270 = pneg %p168
        %p271 = pneg %p165
        %s272 = sand.u32 %s155, 1
        %s273 = scalar_lea.sflag [#allocation9], %s272
        %s274 = sand.u32 %s155, 1
        %s275 = smul.addr %s274, 8
        %s276 = scalar_lea.vmem [#allocation8], %s275
        %p277 = scmp.lt.s32.totalorder %s27, 1
        %s278 = scalar_select %p277, %s27, 1
        %s279 = scalar_lea.vmem %s1, %s278
        %v280 = vld [vmem:[%s238] sm:$0xff]
        %v281 = vld [vmem:[%s279] sm:$0x1]
        %v282 = vld [vmem:[#allocation5] sm:$0xff]
        %v283 = vld [vmem:[#allocation5 + $0x8] sm:$0xff]
        %v284 = vld [vmem:[#allocation5 + $0x10] sm:$0xff]
        %v285 = vld [vmem:[#allocation5 + $0x18] sm:$0xff]
        %v286 = vld [vmem:[%s3] sm:$0x1]
        %v288 = vlaneseq
        %v289 = vshrl.u32 %v288, 7
        %v290 = vsub.s32 0, %v289
        %v291 = vrot.slane %v286, %v290
        %vm293 = vcmask 261120
        %v295 = vsel %vm293, %v280, 0
        %297 = vmatprep.subr.mxu0 0.0
        %298 = vmatpush1.msra.mxu0 %v282
        %299 = vmatprep.subr.mxu0 0.0
        %300 = vmatpush1.msra.mxu0 %v283
        %301 = vmatprep.subr.mxu0 0.0
        %302 = vmatpush1.msra.mxu0 %v284
        %303 = vmatprep.subr.mxu0 0.0
        %304 = vmatpush1.msra.mxu0 %v285
        %305 = vmatprep.subr.mxu0 0.0
        %306 = vmatpush1.msra.mxu0 0.0
        %307 = vmatprep.subr.mxu0 0.0
        %308 = vmatpush1.msra.mxu0 0.0
        %309 = vmatprep.subr.mxu0 0.0
        %310 = vmatpush1.msra.mxu0 0.0
        %311 = vmatprep.subr.mxu0 0.0
        %312 = vmatpush1.msra.mxu0 0.0
        %313 = vmatprep.subr.mxu0 0.0
        %314 = vmatpush1.msra.mxu0 0.0
        %315 = vmatprep.subr.mxu0 0.0
        %316 = vmatpush1.msra.mxu0 0.0
        %317 = vmatprep.subr.mxu0 0.0
        %318 = vmatpush1.msra.mxu0 0.0
        %319 = vmatprep.subr.mxu0 0.0
        %320 = vmatpush1.msra.mxu0 0.0
        %321 = vmatprep.subr.mxu0 0.0
        %322 = vmatpush1.msra.mxu0 0.0
        %323 = vmatprep.subr.mxu0 0.0
        %324 = vmatpush1.msra.mxu0 0.0
        %325 = vmatprep.subr.mxu0 0.0
        %326 = vmatpush1.msra.mxu0 0.0
        %327 = vmatprep.subr.mxu0 0.0
        %328 = vmatpush1.msra.mxu0 0.0
        %329 = vmatprep.subr.mxu0 0.0
        %330 = vmatpush1.msra.mxu0 0.0
        %331 = vmatprep.subr.mxu0 0.0
        %332 = vmatpush1.msra.mxu0 0.0
        %333 = vmatprep.subr.mxu0 0.0
        %334 = vmatpush1.msra.mxu0 0.0
        %335 = vmatprep.subr.mxu0 0.0
        %336 = vmatpush1.msra.mxu0 0.0
        %337 = vmatprep.subr.mxu0 0.0
        %338 = vmatpush1.msra.mxu0 0.0
        %339 = vmatprep.subr.mxu0 0.0
        %340 = vmatpush1.msra.mxu0 0.0
        %341 = vmatprep.subr.mxu0 0.0
        %342 = vmatpush1.msra.mxu0 0.0
        %343 = vmatprep.subr.mxu0 0.0
        %344 = vmatpush1.msra.mxu0 0.0
        %345 = vmatprep.subr.mxu0 0.0
        %346 = vmatpush1.msra.mxu0 0.0
        %347 = vmatprep.subr.mxu0 0.0
        %348 = vmatpush1.msra.mxu0 0.0
        %349 = vmatprep.subr.mxu0 0.0
        %350 = vmatpush1.msra.mxu0 0.0
        %351 = vmatprep.subr.mxu0 0.0
        %352 = vmatpush1.msra.mxu0 0.0
        %353 = vmatprep.subr.mxu0 0.0
        %354 = vmatpush1.msra.mxu0 0.0
        %355 = vmatprep.subr.mxu0 0.0
        %356 = vmatpush1.msra.mxu0 0.0
        %357 = vmatprep.subr.mxu0 0.0
        %358 = vmatpush1.msra.mxu0 0.0
        %359 = vmatprep.subr.mxu0 0.0
        %360 = vmatpush1.msra.mxu0 0.0
        %361 = vmatprep.mubr.f32.mxu0 0.0
        %362 = vmatmul.mubr.f32.gmra.mrb[0].mxu0 %v295
        %v363 = vpop.f32.mrb[0].mxu0
        %v364 = vadd.f32 %v291, %v363
        %v365 = vpop.f32.mrb[0].mxu0
        %366 = vdwg.mxu0
        %368 = vrot.lane.b32.xlu0 %v364, 96
        %v369 = vpop.permute.xlu0 %368
        %vm370 = vcmask 64512
        %v371 = vsel %vm370, %v364, 0
        %v373 = vsel %vm370, %v369, 0
        %375 = vmatprep.subr.mxu0 0.0
        %376 = vmatpush1.xpose.msra.mxu0 %v373
        %377 = vmatprep.subr.mxu0 0.0
        %378 = vmatpush1.xpose.msra.mxu0 0.0
        %379 = vmatprep.subr.mxu0 0.0
        %380 = vmatpush1.xpose.msra.mxu0 0.0
        %381 = vmatprep.subr.mxu0 0.0
        %382 = vmatpush1.xpose.msra.mxu0 0.0
        %383 = vmatprep.subr.mxu0 0.0
        %384 = vmatpush1.xpose.msra.mxu0 0.0
        %385 = vmatprep.subr.mxu0 0.0
        %386 = vmatpush1.xpose.msra.mxu0 0.0
        %387 = vmatprep.subr.mxu0 0.0
        %388 = vmatpush1.xpose.msra.mxu0 0.0
        %389 = vmatprep.subr.mxu0 0.0
        %390 = vmatpush1.xpose.msra.mxu0 0.0
        %391 = vmatprep.subr.mxu0 0.0
        %392 = vmatpush1.xpose.msra.mxu0 0.0
        %393 = vmatprep.subr.mxu0 0.0
        %394 = vmatpush1.xpose.msra.mxu0 0.0
        %395 = vmatprep.subr.mxu0 0.0
        %396 = vmatpush1.xpose.msra.mxu0 0.0
        %397 = vmatprep.subr.mxu0 0.0
        %398 = vmatpush1.xpose.msra.mxu0 0.0
        %399 = vmatprep.subr.mxu0 0.0
        %400 = vmatpush1.xpose.msra.mxu0 0.0
        %401 = vmatprep.subr.mxu0 0.0
        %402 = vmatpush1.xpose.msra.mxu0 0.0
        %403 = vmatprep.subr.mxu0 0.0
        %404 = vmatpush1.xpose.msra.mxu0 0.0
        %405 = vmatprep.subr.mxu0 0.0
        %406 = vmatpush1.xpose.msra.mxu0 0.0
        %407 = vmatprep.subr.mxu0 0.0
        %408 = vmatpush1.xpose.msra.mxu0 0.0
        %409 = vmatprep.subr.mxu0 0.0
        %410 = vmatpush1.xpose.msra.mxu0 0.0
        %411 = vmatprep.subr.mxu0 0.0
        %412 = vmatpush1.xpose.msra.mxu0 0.0
        %413 = vmatprep.subr.mxu0 0.0
        %414 = vmatpush1.xpose.msra.mxu0 0.0
        %415 = vmatprep.subr.mxu0 0.0
        %416 = vmatpush1.xpose.msra.mxu0 0.0
        %417 = vmatprep.subr.mxu0 0.0
        %418 = vmatpush1.xpose.msra.mxu0 0.0
        %419 = vmatprep.subr.mxu0 0.0
        %420 = vmatpush1.xpose.msra.mxu0 0.0
        %421 = vmatprep.subr.mxu0 0.0
        %422 = vmatpush1.xpose.msra.mxu0 0.0
        %423 = vmatprep.subr.mxu0 0.0
        %424 = vmatpush1.xpose.msra.mxu0 0.0
        %425 = vmatprep.subr.mxu0 0.0
        %426 = vmatpush1.xpose.msra.mxu0 0.0
        %427 = vmatprep.subr.mxu0 0.0
        %428 = vmatpush1.xpose.msra.mxu0 0.0
        %429 = vmatprep.subr.mxu0 0.0
        %430 = vmatpush1.xpose.msra.mxu0 0.0
        %431 = vmatprep.subr.mxu0 0.0
        %432 = vmatpush1.xpose.msra.mxu0 0.0
        %433 = vmatprep.subr.mxu0 0.0
        %434 = vmatpush1.xpose.msra.mxu0 0.0
        %435 = vmatprep.subr.mxu0 0.0
        %436 = vmatpush1.xpose.msra.mxu0 0.0
        %437 = vmatprep.subr.mxu0 0.0
        %438 = vmatpush1.xpose.msra.mxu0 0.0
        %439 = vmatprep.mubr.f32.mxu0 0.0
        %440 = vmatmul.mubr.f32.gmra.mrb[0].mxu0 %v371
        %v441 = vpop.f32.mrb[0].mxu0
        %v442 = vadd.f32 0.0, %v441
        %v443 = vpop.f32.mrb[0].mxu0
        %444 = vdwg.mxu0
        %v445 = vmul.f32 %v442, 0.35355338
        %v447 = vlaneseq
        %v448 = vshrl.u32 %v447, 7
        %v449 = vsub.s32 0, %v448
        %v450 = vrot.slane %v281, %v449
        %v452 = vadd.f32 %v445, %v450
        %v453 = vsel %vm370, %v452, -inf
        %454 = vmax.xlane.f32.xlu0 %v453
        %v455 = vpop.xlane.xlu0 %454
        %v456 = vsub.f32 %v452, %v455
        %v457 = vmul.f32 %v456, 1.442695
        %v458 = vpow.pop %v457
        %v459 = vsel %vm370, %v458, 0.0
        %460 = vadd.xlane.f32.xlu0 %v459
        %v461 = vpop.xlane.xlu0 %460
        %v462 = vrcp.pop %v461
        %v463 = vmul.f32 %v458, %v462
        %464 = vrot.lane.b32.xlu0 %v364, 64
        %v465 = vpop.permute.xlu0 %464
        %v468 = vsel %vm370, %v463, 0
        %470 = vmatprep.subr.mxu0 0.0
        %471 = vmatpush1.msra.mxu0 %v465
        %472 = vmatprep.subr.mxu0 0.0
        %473 = vmatpush1.msra.mxu0 0.0
        %474 = vmatprep.subr.mxu0 0.0
        %475 = vmatpush1.msra.mxu0 0.0
        %476 = vmatprep.subr.mxu0 0.0
        %477 = vmatpush1.msra.mxu0 0.0
        %478 = vmatprep.subr.mxu0 0.0
        %479 = vmatpush1.msra.mxu0 0.0
        %480 = vmatprep.subr.mxu0 0.0
        %481 = vmatpush1.msra.mxu0 0.0
        %482 = vmatprep.subr.mxu0 0.0
        %483 = vmatpush1.msra.mxu0 0.0
        %484 = vmatprep.subr.mxu0 0.0
        %485 = vmatpush1.msra.mxu0 0.0
        %486 = vmatprep.subr.mxu0 0.0
        %487 = vmatpush1.msra.mxu0 0.0
        %488 = vmatprep.subr.mxu0 0.0
        %489 = vmatpush1.msra.mxu0 0.0
        %490 = vmatprep.subr.mxu0 0.0
        %491 = vmatpush1.msra.mxu0 0.0
        %492 = vmatprep.subr.mxu0 0.0
        %493 = vmatpush1.msra.mxu0 0.0
        %494 = vmatprep.subr.mxu0 0.0
        %495 = vmatpush1.msra.mxu0 0.0
        %496 = vmatprep.subr.mxu0 0.0
        %497 = vmatpush1.msra.mxu0 0.0
        %498 = vmatprep.subr.mxu0 0.0
        %499 = vmatpush1.msra.mxu0 0.0
        %500 = vmatprep.subr.mxu0 0.0
        %501 = vmatpush1.msra.mxu0 0.0
        %502 = vmatprep.subr.mxu0 0.0
        %503 = vmatpush1.msra.mxu0 0.0
        %504 = vmatprep.subr.mxu0 0.0
        %505 = vmatpush1.msra.mxu0 0.0
        %506 = vmatprep.subr.mxu0 0.0
        %507 = vmatpush1.msra.mxu0 0.0
        %508 = vmatprep.subr.mxu0 0.0
        %509 = vmatpush1.msra.mxu0 0.0
        %510 = vmatprep.subr.mxu0 0.0
        %511 = vmatpush1.msra.mxu0 0.0
        %512 = vmatprep.subr.mxu0 0.0
        %513 = vmatpush1.msra.mxu0 0.0
        %514 = vmatprep.subr.mxu0 0.0
        %515 = vmatpush1.msra.mxu0 0.0
        %516 = vmatprep.subr.mxu0 0.0
        %517 = vmatpush1.msra.mxu0 0.0
        %518 = vmatprep.subr.mxu0 0.0
        %519 = vmatpush1.msra.mxu0 0.0
        %520 = vmatprep.subr.mxu0 0.0
        %521 = vmatpush1.msra.mxu0 0.0
        %522 = vmatprep.subr.mxu0 0.0
        %523 = vmatpush1.msra.mxu0 0.0
        %524 = vmatprep.subr.mxu0 0.0
        %525 = vmatpush1.msra.mxu0 0.0
        %526 = vmatprep.subr.mxu0 0.0
        %527 = vmatpush1.msra.mxu0 0.0
        %528 = vmatprep.subr.mxu0 0.0
        %529 = vmatpush1.msra.mxu0 0.0
        %530 = vmatprep.subr.mxu0 0.0
        %531 = vmatpush1.msra.mxu0 0.0
        %532 = vmatprep.subr.mxu0 0.0
        %533 = vmatpush1.msra.mxu0 0.0
        %534 = vmatprep.mubr.f32.mxu0 0.0
        %535 = vmatmul.mubr.f32.gmra.mrb[0].mxu0 %v468
        %v536 = vpop.f32.mrb[0].mxu0
        %v537 = vadd.f32 0.0, %v536
        %v538 = vpop.f32.mrb[0].mxu0
        %539 = vdwg.mxu0
        %540 = vrot.lane.b32.xlu0 %v364, 120
        %v541 = vpop.permute.xlu0 %540
        %542 = vrot.lane.b32.xlu0 %v364, 88
        %v543 = vpop.permute.xlu0 %542
        %v544 = vsel %vm370, %v541, 0
        %v546 = vsel %vm370, %v543, 0
        %548 = vmatprep.subr.mxu0 0.0
        %549 = vmatpush1.xpose.msra.mxu0 %v546
        %550 = vmatprep.subr.mxu0 0.0
        %551 = vmatpush1.xpose.msra.mxu0 0.0
        %552 = vmatprep.subr.mxu0 0.0
        %553 = vmatpush1.xpose.msra.mxu0 0.0
        %554 = vmatprep.subr.mxu0 0.0
        %555 = vmatpush1.xpose.msra.mxu0 0.0
        %556 = vmatprep.subr.mxu0 0.0
        %557 = vmatpush1.xpose.msra.mxu0 0.0
        %558 = vmatprep.subr.mxu0 0.0
        %559 = vmatpush1.xpose.msra.mxu0 0.0
        %560 = vmatprep.subr.mxu0 0.0
        %561 = vmatpush1.xpose.msra.mxu0 0.0
        %562 = vmatprep.subr.mxu0 0.0
        %563 = vmatpush1.xpose.msra.mxu0 0.0
        %564 = vmatprep.subr.mxu0 0.0
        %565 = vmatpush1.xpose.msra.mxu0 0.0
        %566 = vmatprep.subr.mxu0 0.0
        %567 = vmatpush1.xpose.msra.mxu0 0.0
        %568 = vmatprep.subr.mxu0 0.0
        %569 = vmatpush1.xpose.msra.mxu0 0.0
        %570 = vmatprep.subr.mxu0 0.0
        %571 = vmatpush1.xpose.msra.mxu0 0.0
        %572 = vmatprep.subr.mxu0 0.0
        %573 = vmatpush1.xpose.msra.mxu0 0.0
        %574 = vmatprep.subr.mxu0 0.0
        %575 = vmatpush1.xpose.msra.mxu0 0.0
        %576 = vmatprep.subr.mxu0 0.0
        %577 = vmatpush1.xpose.msra.mxu0 0.0
        %578 = vmatprep.subr.mxu0 0.0
        %579 = vmatpush1.xpose.msra.mxu0 0.0
        %580 = vmatprep.subr.mxu0 0.0
        %581 = vmatpush1.xpose.msra.mxu0 0.0
        %582 = vmatprep.subr.mxu0 0.0
        %583 = vmatpush1.xpose.msra.mxu0 0.0
        %584 = vmatprep.subr.mxu0 0.0
        %585 = vmatpush1.xpose.msra.mxu0 0.0
        %586 = vmatprep.subr.mxu0 0.0
        %587 = vmatpush1.xpose.msra.mxu0 0.0
        %588 = vmatprep.subr.mxu0 0.0
        %589 = vmatpush1.xpose.msra.mxu0 0.0
        %590 = vmatprep.subr.mxu0 0.0
        %591 = vmatpush1.xpose.msra.mxu0 0.0
        %592 = vmatprep.subr.mxu0 0.0
        %593 = vmatpush1.xpose.msra.mxu0 0.0
        %594 = vmatprep.subr.mxu0 0.0
        %595 = vmatpush1.xpose.msra.mxu0 0.0
        %596 = vmatprep.subr.mxu0 0.0
        %597 = vmatpush1.xpose.msra.mxu0 0.0
        %598 = vmatprep.subr.mxu0 0.0
        %599 = vmatpush1.xpose.msra.mxu0 0.0
        %600 = vmatprep.subr.mxu0 0.0
        %601 = vmatpush1.xpose.msra.mxu0 0.0
        %602 = vmatprep.subr.mxu0 0.0
        %603 = vmatpush1.xpose.msra.mxu0 0.0
        %604 = vmatprep.subr.mxu0 0.0
        %605 = vmatpush1.xpose.msra.mxu0 0.0
        %606 = vmatprep.subr.mxu0 0.0
        %607 = vmatpush1.xpose.msra.mxu0 0.0
        %608 = vmatprep.subr.mxu0 0.0
        %609 = vmatpush1.xpose.msra.mxu0 0.0
        %610 = vmatprep.subr.mxu0 0.0
        %611 = vmatpush1.xpose.msra.mxu0 0.0
        %612 = vmatprep.mubr.f32.mxu0 0.0
        %613 = vmatmul.mubr.f32.gmra.mrb[0].mxu0 %v544
        %v614 = vpop.f32.mrb[0].mxu0
        %v615 = vadd.f32 0.0, %v614
        %v616 = vpop.f32.mrb[0].mxu0
        %617 = vdwg.mxu0
        %v618 = vmul.f32 %v615, 0.35355338
        %v619 = vadd.f32 %v618, %v450
        %v620 = vsel %vm370, %v619, -inf
        %621 = vmax.xlane.f32.xlu0 %v620
        %v622 = vpop.xlane.xlu0 %621
        %v623 = vsub.f32 %v619, %v622
        %v624 = vmul.f32 %v623, 1.442695
        %v625 = vpow.pop %v624
        %v626 = vsel %vm370, %v625, 0.0
        %627 = vadd.xlane.f32.xlu0 %v626
        %v628 = vpop.xlane.xlu0 %627
        %v629 = vrcp.pop %v628
        %v630 = vmul.f32 %v625, %v629
        %631 = vrot.lane.b32.xlu0 %v364, 56
        %v632 = vpop.permute.xlu0 %631
        %v635 = vsel %vm370, %v630, 0
        %637 = vmatprep.subr.mxu0 0.0
        %638 = vmatpush1.msra.mxu0 %v632
        %639 = vmatprep.subr.mxu0 0.0
        %640 = vmatpush1.msra.mxu0 0.0
        %641 = vmatprep.subr.mxu0 0.0
        %642 = vmatpush1.msra.mxu0 0.0
        %643 = vmatprep.subr.mxu0 0.0
        %644 = vmatpush1.msra.mxu0 0.0
        %645 = vmatprep.subr.mxu0 0.0
        %646 = vmatpush1.msra.mxu0 0.0
        %647 = vmatprep.subr.mxu0 0.0
        %648 = vmatpush1.msra.mxu0 0.0
        %649 = vmatprep.subr.mxu0 0.0
        %650 = vmatpush1.msra.mxu0 0.0
        %651 = vmatprep.subr.mxu0 0.0
        %652 = vmatpush1.msra.mxu0 0.0
        %653 = vmatprep.subr.mxu0 0.0
        %654 = vmatpush1.msra.mxu0 0.0
        %655 = vmatprep.subr.mxu0 0.0
        %656 = vmatpush1.msra.mxu0 0.0
        %657 = vmatprep.subr.mxu0 0.0
        %658 = vmatpush1.msra.mxu0 0.0
        %659 = vmatprep.subr.mxu0 0.0
        %660 = vmatpush1.msra.mxu0 0.0
        %661 = vmatprep.subr.mxu0 0.0
        %662 = vmatpush1.msra.mxu0 0.0
        %663 = vmatprep.subr.mxu0 0.0
        %664 = vmatpush1.msra.mxu0 0.0
        %665 = vmatprep.subr.mxu0 0.0
        %666 = vmatpush1.msra.mxu0 0.0
        %667 = vmatprep.subr.mxu0 0.0
        %668 = vmatpush1.msra.mxu0 0.0
        %669 = vmatprep.subr.mxu0 0.0
        %670 = vmatpush1.msra.mxu0 0.0
        %671 = vmatprep.subr.mxu0 0.0
        %672 = vmatpush1.msra.mxu0 0.0
        %673 = vmatprep.subr.mxu0 0.0
        %674 = vmatpush1.msra.mxu0 0.0
        %675 = vmatprep.subr.mxu0 0.0
        %676 = vmatpush1.msra.mxu0 0.0
        %677 = vmatprep.subr.mxu0 0.0
        %678 = vmatpush1.msra.mxu0 0.0
        %679 = vmatprep.subr.mxu0 0.0
        %680 = vmatpush1.msra.mxu0 0.0
        %681 = vmatprep.subr.mxu0 0.0
        %682 = vmatpush1.msra.mxu0 0.0
        %683 = vmatprep.subr.mxu0 0.0
        %684 = vmatpush1.msra.mxu0 0.0
        %685 = vmatprep.subr.mxu0 0.0
        %686 = vmatpush1.msra.mxu0 0.0
        %687 = vmatprep.subr.mxu0 0.0
        %688 = vmatpush1.msra.mxu0 0.0
        %689 = vmatprep.subr.mxu0 0.0
        %690 = vmatpush1.msra.mxu0 0.0
        %691 = vmatprep.subr.mxu0 0.0
        %692 = vmatpush1.msra.mxu0 0.0
        %693 = vmatprep.subr.mxu0 0.0
        %694 = vmatpush1.msra.mxu0 0.0
        %695 = vmatprep.subr.mxu0 0.0
        %696 = vmatpush1.msra.mxu0 0.0
        %697 = vmatprep.subr.mxu0 0.0
        %698 = vmatpush1.msra.mxu0 0.0
        %699 = vmatprep.subr.mxu0 0.0
        %700 = vmatpush1.msra.mxu0 0.0
        %701 = vmatprep.mubr.f32.mxu0 0.0
        %702 = vmatmul.mubr.f32.gmra.mrb[0].mxu0 %v635
        %v703 = vpop.f32.mrb[0].mxu0
        %v704 = vadd.f32 0.0, %v703
        %v705 = vpop.f32.mrb[0].mxu0
        %706 = vdwg.mxu0
        %707 = vrot.lane.b32.xlu0 %v364, 112
        %v708 = vpop.permute.xlu0 %707
        %709 = vrot.lane.b32.xlu0 %v364, 80
        %v710 = vpop.permute.xlu0 %709
        %v711 = vsel %vm370, %v708, 0
        %v713 = vsel %vm370, %v710, 0
        %715 = vmatprep.subr.mxu0 0.0
        %716 = vmatpush1.xpose.msra.mxu0 %v713
        %717 = vmatprep.subr.mxu0 0.0
        %718 = vmatpush1.xpose.msra.mxu0 0.0
        %719 = vmatprep.subr.mxu0 0.0
        %720 = vmatpush1.xpose.msra.mxu0 0.0
        %721 = vmatprep.subr.mxu0 0.0
        %722 = vmatpush1.xpose.msra.mxu0 0.0
        %723 = vmatprep.subr.mxu0 0.0
        %724 = vmatpush1.xpose.msra.mxu0 0.0
        %725 = vmatprep.subr.mxu0 0.0
        %726 = vmatpush1.xpose.msra.mxu0 0.0
        %727 = vmatprep.subr.mxu0 0.0
        %728 = vmatpush1.xpose.msra.mxu0 0.0
        %729 = vmatprep.subr.mxu0 0.0
        %730 = vmatpush1.xpose.msra.mxu0 0.0
        %731 = vmatprep.subr.mxu0 0.0
        %732 = vmatpush1.xpose.msra.mxu0 0.0
        %733 = vmatprep.subr.mxu0 0.0
        %734 = vmatpush1.xpose.msra.mxu0 0.0
        %735 = vmatprep.subr.mxu0 0.0
        %736 = vmatpush1.xpose.msra.mxu0 0.0
        %737 = vmatprep.subr.mxu0 0.0
        %738 = vmatpush1.xpose.msra.mxu0 0.0
        %739 = vmatprep.subr.mxu0 0.0
        %740 = vmatpush1.xpose.msra.mxu0 0.0
        %741 = vmatprep.subr.mxu0 0.0
        %742 = vmatpush1.xpose.msra.mxu0 0.0
        %743 = vmatprep.subr.mxu0 0.0
        %744 = vmatpush1.xpose.msra.mxu0 0.0
        %745 = vmatprep.subr.mxu0 0.0
        %746 = vmatpush1.xpose.msra.mxu0 0.0
        %747 = vmatprep.subr.mxu0 0.0
        %748 = vmatpush1.xpose.msra.mxu0 0.0
        %749 = vmatprep.subr.mxu0 0.0
        %750 = vmatpush1.xpose.msra.mxu0 0.0
        %751 = vmatprep.subr.mxu0 0.0
        %752 = vmatpush1.xpose.msra.mxu0 0.0
        %753 = vmatprep.subr.mxu0 0.0
        %754 = vmatpush1.xpose.msra.mxu0 0.0
        %755 = vmatprep.subr.mxu0 0.0
        %756 = vmatpush1.xpose.msra.mxu0 0.0
        %757 = vmatprep.subr.mxu0 0.0
        %758 = vmatpush1.xpose.msra.mxu0 0.0
        %759 = vmatprep.subr.mxu0 0.0
        %760 = vmatpush1.xpose.msra.mxu0 0.0
        %761 = vmatprep.subr.mxu0 0.0
        %762 = vmatpush1.xpose.msra.mxu0 0.0
        %763 = vmatprep.subr.mxu0 0.0
        %764 = vmatpush1.xpose.msra.mxu0 0.0
        %765 = vmatprep.subr.mxu0 0.0
        %766 = vmatpush1.xpose.msra.mxu0 0.0
        %767 = vmatprep.subr.mxu0 0.0
        %768 = vmatpush1.xpose.msra.mxu0 0.0
        %769 = vmatprep.subr.mxu0 0.0
        %770 = vmatpush1.xpose.msra.mxu0 0.0
        %771 = vmatprep.subr.mxu0 0.0
        %772 = vmatpush1.xpose.msra.mxu0 0.0
        %773 = vmatprep.subr.mxu0 0.0
        %774 = vmatpush1.xpose.msra.mxu0 0.0
        %775 = vmatprep.subr.mxu0 0.0
        %776 = vmatpush1.xpose.msra.mxu0 0.0
        %777 = vmatprep.subr.mxu0 0.0
        %778 = vmatpush1.xpose.msra.mxu0 0.0
        %779 = vmatprep.mubr.f32.mxu0 0.0
        %780 = vmatmul.mubr.f32.gmra.mrb[0].mxu0 %v711
        %v781 = vpop.f32.mrb[0].mxu0
        %v782 = vadd.f32 0.0, %v781
        %v783 = vpop.f32.mrb[0].mxu0
        %784 = vdwg.mxu0
        %v785 = vmul.f32 %v782, 0.35355338
        %v786 = vadd.f32 %v785, %v450
        %v787 = vsel %vm370, %v786, -inf
        %788 = vmax.xlane.f32.xlu0 %v787
        %v789 = vpop.xlane.xlu0 %788
        %v790 = vsub.f32 %v786, %v789
        %v791 = vmul.f32 %v790, 1.442695
        %v792 = vpow.pop %v791
        %v793 = vsel %vm370, %v792, 0.0
        %794 = vadd.xlane.f32.xlu0 %v793
        %v795 = vpop.xlane.xlu0 %794
        %v796 = vrcp.pop %v795
        %v797 = vmul.f32 %v792, %v796
        %798 = vrot.lane.b32.xlu0 %v364, 48
        %v799 = vpop.permute.xlu0 %798
        %v802 = vsel %vm370, %v797, 0
        %804 = vmatprep.subr.mxu0 0.0
        %805 = vmatpush1.msra.mxu0 %v799
        %806 = vmatprep.subr.mxu0 0.0
        %807 = vmatpush1.msra.mxu0 0.0
        %808 = vmatprep.subr.mxu0 0.0
        %809 = vmatpush1.msra.mxu0 0.0
        %810 = vmatprep.subr.mxu0 0.0
        %811 = vmatpush1.msra.mxu0 0.0
        %812 = vmatprep.subr.mxu0 0.0
        %813 = vmatpush1.msra.mxu0 0.0
        %814 = vmatprep.subr.mxu0 0.0
        %815 = vmatpush1.msra.mxu0 0.0
        %816 = vmatprep.subr.mxu0 0.0
        %817 = vmatpush1.msra.mxu0 0.0
        %818 = vmatprep.subr.mxu0 0.0
        %819 = vmatpush1.msra.mxu0 0.0
        %820 = vmatprep.subr.mxu0 0.0
        %821 = vmatpush1.msra.mxu0 0.0
        %822 = vmatprep.subr.mxu0 0.0
        %823 = vmatpush1.msra.mxu0 0.0
        %824 = vmatprep.subr.mxu0 0.0
        %825 = vmatpush1.msra.mxu0 0.0
        %826 = vmatprep.subr.mxu0 0.0
        %827 = vmatpush1.msra.mxu0 0.0
        %828 = vmatprep.subr.mxu0 0.0
        %829 = vmatpush1.msra.mxu0 0.0
        %830 = vmatprep.subr.mxu0 0.0
        %831 = vmatpush1.msra.mxu0 0.0
        %832 = vmatprep.subr.mxu0 0.0
        %833 = vmatpush1.msra.mxu0 0.0
        %834 = vmatprep.subr.mxu0 0.0
        %835 = vmatpush1.msra.mxu0 0.0
        %836 = vmatprep.subr.mxu0 0.0
        %837 = vmatpush1.msra.mxu0 0.0
        %838 = vmatprep.subr.mxu0 0.0
        %839 = vmatpush1.msra.mxu0 0.0
        %840 = vmatprep.subr.mxu0 0.0
        %841 = vmatpush1.msra.mxu0 0.0
        %842 = vmatprep.subr.mxu0 0.0
        %843 = vmatpush1.msra.mxu0 0.0
        %844 = vmatprep.subr.mxu0 0.0
        %845 = vmatpush1.msra.mxu0 0.0
        %846 = vmatprep.subr.mxu0 0.0
        %847 = vmatpush1.msra.mxu0 0.0
        %848 = vmatprep.subr.mxu0 0.0
        %849 = vmatpush1.msra.mxu0 0.0
        %850 = vmatprep.subr.mxu0 0.0
        %851 = vmatpush1.msra.mxu0 0.0
        %852 = vmatprep.subr.mxu0 0.0
        %853 = vmatpush1.msra.mxu0 0.0
        %854 = vmatprep.subr.mxu0 0.0
        %855 = vmatpush1.msra.mxu0 0.0
        %856 = vmatprep.subr.mxu0 0.0
        %857 = vmatpush1.msra.mxu0 0.0
        %858 = vmatprep.subr.mxu0 0.0
        %859 = vmatpush1.msra.mxu0 0.0
        %860 = vmatprep.subr.mxu0 0.0
        %861 = vmatpush1.msra.mxu0 0.0
        %862 = vmatprep.subr.mxu0 0.0
        %863 = vmatpush1.msra.mxu0 0.0
        %864 = vmatprep.subr.mxu0 0.0
        %865 = vmatpush1.msra.mxu0 0.0
        %866 = vmatprep.subr.mxu0 0.0
        %867 = vmatpush1.msra.mxu0 0.0
        %868 = vmatprep.mubr.f32.mxu0 0.0
        %869 = vmatmul.mubr.f32.gmra.mrb[0].mxu0 %v802
        %v870 = vpop.f32.mrb[0].mxu0
        %v871 = vadd.f32 0.0, %v870
        %v872 = vpop.f32.mrb[0].mxu0
        %873 = vdwg.mxu0
        %874 = vrot.lane.b32.xlu0 %v364, 104
        %v875 = vpop.permute.xlu0 %874
        %876 = vrot.lane.b32.xlu0 %v364, 72
        %v877 = vpop.permute.xlu0 %876
        %v878 = vsel %vm370, %v875, 0
        %v880 = vsel %vm370, %v877, 0
        %882 = vmatprep.subr.mxu0 0.0
        %883 = vmatpush1.xpose.msra.mxu0 %v880
        %884 = vmatprep.subr.mxu0 0.0
        %885 = vmatpush1.xpose.msra.mxu0 0.0
        %886 = vmatprep.subr.mxu0 0.0
        %887 = vmatpush1.xpose.msra.mxu0 0.0
        %888 = vmatprep.subr.mxu0 0.0
        %889 = vmatpush1.xpose.msra.mxu0 0.0
        %890 = vmatprep.subr.mxu0 0.0
        %891 = vmatpush1.xpose.msra.mxu0 0.0
        %892 = vmatprep.subr.mxu0 0.0
        %893 = vmatpush1.xpose.msra.mxu0 0.0
        %894 = vmatprep.subr.mxu0 0.0
        %895 = vmatpush1.xpose.msra.mxu0 0.0
        %896 = vmatprep.subr.mxu0 0.0
        %897 = vmatpush1.xpose.msra.mxu0 0.0
        %898 = vmatprep.subr.mxu0 0.0
        %899 = vmatpush1.xpose.msra.mxu0 0.0
        %900 = vmatprep.subr.mxu0 0.0
        %901 = vmatpush1.xpose.msra.mxu0 0.0
        %902 = vmatprep.subr.mxu0 0.0
        %903 = vmatpush1.xpose.msra.mxu0 0.0
        %904 = vmatprep.subr.mxu0 0.0
        %905 = vmatpush1.xpose.msra.mxu0 0.0
        %906 = vmatprep.subr.mxu0 0.0
        %907 = vmatpush1.xpose.msra.mxu0 0.0
        %908 = vmatprep.subr.mxu0 0.0
        %909 = vmatpush1.xpose.msra.mxu0 0.0
        %910 = vmatprep.subr.mxu0 0.0
        %911 = vmatpush1.xpose.msra.mxu0 0.0
        %912 = vmatprep.subr.mxu0 0.0
        %913 = vmatpush1.xpose.msra.mxu0 0.0
        %914 = vmatprep.subr.mxu0 0.0
        %915 = vmatpush1.xpose.msra.mxu0 0.0
        %916 = vmatprep.subr.mxu0 0.0
        %917 = vmatpush1.xpose.msra.mxu0 0.0
        %918 = vmatprep.subr.mxu0 0.0
        %919 = vmatpush1.xpose.msra.mxu0 0.0
        %920 = vmatprep.subr.mxu0 0.0
        %921 = vmatpush1.xpose.msra.mxu0 0.0
        %922 = vmatprep.subr.mxu0 0.0
        %923 = vmatpush1.xpose.msra.mxu0 0.0
        %924 = vmatprep.subr.mxu0 0.0
        %925 = vmatpush1.xpose.msra.mxu0 0.0
        %926 = vmatprep.subr.mxu0 0.0
        %927 = vmatpush1.xpose.msra.mxu0 0.0
        %928 = vmatprep.subr.mxu0 0.0
        %929 = vmatpush1.xpose.msra.mxu0 0.0
        %930 = vmatprep.subr.mxu0 0.0
        %931 = vmatpush1.xpose.msra.mxu0 0.0
        %932 = vmatprep.subr.mxu0 0.0
        %933 = vmatpush1.xpose.msra.mxu0 0.0
        %934 = vmatprep.subr.mxu0 0.0
        %935 = vmatpush1.xpose.msra.mxu0 0.0
        %936 = vmatprep.subr.mxu0 0.0
        %937 = vmatpush1.xpose.msra.mxu0 0.0
        %938 = vmatprep.subr.mxu0 0.0
        %939 = vmatpush1.xpose.msra.mxu0 0.0
        %940 = vmatprep.subr.mxu0 0.0
        %941 = vmatpush1.xpose.msra.mxu0 0.0
        %942 = vmatprep.subr.mxu0 0.0
        %943 = vmatpush1.xpose.msra.mxu0 0.0
        %944 = vmatprep.subr.mxu0 0.0
        %945 = vmatpush1.xpose.msra.mxu0 0.0
        %946 = vmatprep.mubr.f32.mxu0 0.0
        %947 = vmatmul.mubr.f32.gmra.mrb[0].mxu0 %v878
        %v948 = vpop.f32.mrb[0].mxu0
        %v949 = vadd.f32 0.0, %v948
        %v950 = vpop.f32.mrb[0].mxu0
        %951 = vdwg.mxu0
        %v952 = vmul.f32 %v949, 0.35355338
        %v953 = vadd.f32 %v952, %v450
        %v954 = vsel %vm370, %v953, -inf
        %955 = vmax.xlane.f32.xlu0 %v954
        %v956 = vpop.xlane.xlu0 %955
        %v957 = vsub.f32 %v953, %v956
        %v958 = vmul.f32 %v957, 1.442695
        %v959 = vpow.pop %v958
        %v960 = vsel %vm370, %v959, 0.0
        %961 = vadd.xlane.f32.xlu0 %v960
        %v962 = vpop.xlane.xlu0 %961
        %v963 = vrcp.pop %v962
        %v964 = vmul.f32 %v959, %v963
        %965 = vrot.lane.b32.xlu0 %v364, 40
        %v966 = vpop.permute.xlu0 %965
        %v969 = vsel %vm370, %v964, 0
        %971 = vmatprep.subr.mxu0 0.0
        %972 = vmatpush1.msra.mxu0 %v966
        %973 = vmatprep.subr.mxu0 0.0
        %974 = vmatpush1.msra.mxu0 0.0
        %975 = vmatprep.subr.mxu0 0.0
        %976 = vmatpush1.msra.mxu0 0.0
        %977 = vmatprep.subr.mxu0 0.0
        %978 = vmatpush1.msra.mxu0 0.0
        %979 = vmatprep.subr.mxu0 0.0
        %980 = vmatpush1.msra.mxu0 0.0
        %981 = vmatprep.subr.mxu0 0.0
        %982 = vmatpush1.msra.mxu0 0.0
        %983 = vmatprep.subr.mxu0 0.0
        %984 = vmatpush1.msra.mxu0 0.0
        %985 = vmatprep.subr.mxu0 0.0
        %986 = vmatpush1.msra.mxu0 0.0
        %987 = vmatprep.subr.mxu0 0.0
        %988 = vmatpush1.msra.mxu0 0.0
        %989 = vmatprep.subr.mxu0 0.0
        %990 = vmatpush1.msra.mxu0 0.0
        %991 = vmatprep.subr.mxu0 0.0
        %992 = vmatpush1.msra.mxu0 0.0
        %993 = vmatprep.subr.mxu0 0.0
        %994 = vmatpush1.msra.mxu0 0.0
        %995 = vmatprep.subr.mxu0 0.0
        %996 = vmatpush1.msra.mxu0 0.0
        %997 = vmatprep.subr.mxu0 0.0
        %998 = vmatpush1.msra.mxu0 0.0
        %999 = vmatprep.subr.mxu0 0.0
        %1000 = vmatpush1.msra.mxu0 0.0
        %1001 = vmatprep.subr.mxu0 0.0
        %1002 = vmatpush1.msra.mxu0 0.0
        %1003 = vmatprep.subr.mxu0 0.0
        %1004 = vmatpush1.msra.mxu0 0.0
        %1005 = vmatprep.subr.mxu0 0.0
        %1006 = vmatpush1.msra.mxu0 0.0
        %1007 = vmatprep.subr.mxu0 0.0
        %1008 = vmatpush1.msra.mxu0 0.0
        %1009 = vmatprep.subr.mxu0 0.0
        %1010 = vmatpush1.msra.mxu0 0.0
        %1011 = vmatprep.subr.mxu0 0.0
        %1012 = vmatpush1.msra.mxu0 0.0
        %1013 = vmatprep.subr.mxu0 0.0
        %1014 = vmatpush1.msra.mxu0 0.0
        %1015 = vmatprep.subr.mxu0 0.0
        %1016 = vmatpush1.msra.mxu0 0.0
        %1017 = vmatprep.subr.mxu0 0.0
        %1018 = vmatpush1.msra.mxu0 0.0
        %1019 = vmatprep.subr.mxu0 0.0
        %1020 = vmatpush1.msra.mxu0 0.0
        %1021 = vmatprep.subr.mxu0 0.0
        %1022 = vmatpush1.msra.mxu0 0.0
        %1023 = vmatprep.subr.mxu0 0.0
        %1024 = vmatpush1.msra.mxu0 0.0
        %1025 = vmatprep.subr.mxu0 0.0
        %1026 = vmatpush1.msra.mxu0 0.0
        %1027 = vmatprep.subr.mxu0 0.0
        %1028 = vmatpush1.msra.mxu0 0.0
        %1029 = vmatprep.subr.mxu0 0.0
        %1030 = vmatpush1.msra.mxu0 0.0
        %1031 = vmatprep.subr.mxu0 0.0
        %1032 = vmatpush1.msra.mxu0 0.0
        %1033 = vmatprep.subr.mxu0 0.0
        %1034 = vmatpush1.msra.mxu0 0.0
        %1035 = vmatprep.mubr.f32.mxu0 0.0
        %1036 = vmatmul.mubr.f32.gmra.mrb[0].mxu0 %v969
        %v1037 = vpop.f32.mrb[0].mxu0
        %v1038 = vadd.f32 0.0, %v1037
        %v1039 = vpop.f32.mrb[0].mxu0
        %1040 = vdwg.mxu0
        %1042 = vrot.lane.b32.xlu0 %v704, 8
        %v1043 = vpop.permute.xlu0 %1042
        %1046 = vrot.lane.b32.xlu0 %v871, 16
        %v1047 = vpop.permute.xlu0 %1046
        %1050 = vrot.lane.b32.xlu0 %v1038, 24
        %v1051 = vpop.permute.xlu0 %1050
        %v1053 = vsel %vm370, %v537, %v1043
        %vm1054 = vcmask 130048
        %v1055 = vsel %vm1054, %v1053, %v1047
        %vm1056 = vcmask 195584
        %v1057 = vsel %vm1056, %v1055, %v1051
        %1058 = vst.msk [vmem:[%s269] sm:$0xff] %vm293, %v1057
        %1059 = vrot.lane.b32.xlu0 %v630, 8
        %v1060 = vpop.permute.xlu0 %1059
        %1062 = vrot.lane.b32.xlu0 %v797, 16
        %v1063 = vpop.permute.xlu0 %1062
        %1065 = vrot.lane.b32.xlu0 %v964, 24
        %v1066 = vpop.permute.xlu0 %1065
        %v1068 = vsel %vm370, %v463, %v1060
        %v1069 = vsel %vm1054, %v1068, %v1063
        %v1070 = vsel %vm1056, %v1069, %v1066
        %1071 = vst.msk [vmem:[%s276] sm:$0xff] %vm293, %v1070
        %s1072 = sand.u32 %s129, 1
        %s1073 = scalar_lea.sflag [#allocation4], %s1072
        %s1074 = sand.u32 %s129, 1
        %s1075 = smul.addr %s1074, 8
        %s1076 = scalar_lea.vmem [#allocation7], %s1075
        %s1077 = sand.u32 %s155, 1
        %s1078 = scalar_lea.sflag [#allocation9], %s1077
        %s1079 = sand.u32 %s155, 1
        %s1080 = smul.addr %s1079, 8
        %s1081 = scalar_lea.vmem [#allocation8], %s1080
        // Predicated region
        $region45: #{tpu_custom_call.1} parent=35 // pred_check
          %p1082 = pneg %p139
        $region46: #{tpu_custom_call.1} parent=35 // pred_check_branch
          %1084 = sbr.rel (%p1082) target = $region48
        $region47: #{tpu_custom_call.1} parent=35 // pred_region
          %s1086 = ssub.s32 128, 128
          %1087 = vsyncadd %s1073, %s1086
          %s1088 = smul.addr %s27, 128
          %s1089 = scalar_lea.hbm %s4, %s1088
          %s1091 = sshll.u32 %s1076, 4
          %s1092 = int_to_ptr.vmem [resolvable:$true] %s1091
          %1094 = dma.vmem_to_hbm [thread:$0]  %s1092, 128, %s1089, %s1073
        $region48: #{tpu_custom_call.1} parent=35 // pred_fallthru
          _
        // Predicated region
        $region49: #{tpu_custom_call.1} parent=35 // pred_check
          %p1095 = pneg %p165
        $region50: #{tpu_custom_call.1} parent=35 // pred_check_branch
          %1097 = sbr.rel (%p1095) target = $region52
        $region51: #{tpu_custom_call.1} parent=35 // pred_region
          %s1099 = ssub.s32 128, 128
          %1100 = vsyncadd %s1078, %s1099
          %s1101 = smul.addr %s27, 128
          %s1102 = scalar_lea.hbm %s5, %s1101
          %s1104 = sshll.u32 %s1081, 4
          %s1105 = int_to_ptr.vmem [resolvable:$true] %s1104
          %1107 = dma.vmem_to_hbm [thread:$0]  %s1105, 128, %s1102, %s1078
        $region52: #{tpu_custom_call.1} parent=35 // pred_fallthru
          _
      $region36: #{tpu_custom_call.1} parent=5 // pred_fallthru
        _
      %p1108 = scmp.le.s32.totalorder 2, %s22
      // Predicated region
      $region53: #{tpu_custom_call.1} parent=5 // pred_check
        %p1109 = pneg %p1108
      $region54: #{tpu_custom_call.1} parent=5 // pred_check_branch
        %1111 = sbr.rel (%p1109) target = $region56
      $region55: #{tpu_custom_call.1} parent=5 // pred_region
        %s1112 = ssub.s32 %s22, 2
        // Predicated region
        $region57: #{tpu_custom_call.1} parent=55 // pred_check
          %p1113 = pneg %p145
        $region58: #{tpu_custom_call.1} parent=55 // pred_check_branch
          %1115 = sbr.rel (%p1113) target = $region60
        $region59: #{tpu_custom_call.1} parent=55 // pred_region
          %s1116 = sand.u32 %s130, 1
          %s1117 = scalar_lea.sflag [#allocation4], %s1116
          %s1118 = sand.u32 %s130, 1
          %s1119 = smul.addr %s1118, 8
          %s1120 = scalar_lea.vmem [#allocation7], %s1119
          %1121 = dma.done %s1117, 128
        $region60: #{tpu_custom_call.1} parent=55 // pred_fallthru
          _
        // Predicated region
        $region61: #{tpu_custom_call.1} parent=55 // pred_check
          %p1122 = pneg %p171
        $region62: #{tpu_custom_call.1} parent=55 // pred_check_branch
          %1124 = sbr.rel (%p1122) target = $region64
        $region63: #{tpu_custom_call.1} parent=55 // pred_region
          %s1125 = sand.u32 %s156, 1
          %s1126 = scalar_lea.sflag [#allocation9], %s1125
          %s1127 = sand.u32 %s156, 1
          %s1128 = smul.addr %s1127, 8
          %s1129 = scalar_lea.vmem [#allocation8], %s1128
          %1130 = dma.done %s1126, 128
        $region64: #{tpu_custom_call.1} parent=55 // pred_fallthru
          _
      $region56: #{tpu_custom_call.1} parent=5 // pred_fallthru
        _
    $region6: #{tpu_custom_call.1} parent=1 // loop_footer
      %s26 = sadd.s32 1, %s22
    $region7: #{tpu_custom_call.1} parent=1 // loop_footer_branch
      %21 = sbr.rel target = $region3
    $region8: #{tpu_custom_call.1} parent=1 // loop_exit
      _
    %1131 = vsyncpa [#allocation3], 1
    %s1132 = scalar_lea.sflag [#allocation3], 1
    %1133 = vsyncpa %s1132, 1
    %1134 = vsyncpa [#allocation6], 1
    %1135 = vsyncpa [#allocation4], 1
    %s1136 = scalar_lea.sflag [#allocation4], 1
    %1137 = vsyncpa %s1136, 1
    %1138 = vsyncpa [#allocation9], 1
    %s1139 = scalar_lea.sflag [#allocation9], 1
    %1140 = vsyncpa %s1139, 1

</llo_original>
